<compile_context>
chip_gen: v5e
topology: v5e:2x2
jax: 0.10.0
libtpu: 0.0.40
codegen_flags: <defaults>
</compile_context>

<pallas_src>
import functools

import jax
import jax.numpy as jnp
from jax import lax
from jax.experimental import pallas as pl
from jax.experimental.pallas import tpu as pltpu


def _loss_kernel(pred_ref, label_ref, out_ref, acc_ref, *,
                 smoothing, n_valid, w0, w1, w2):
    """One batch tile.

    pred_ref:  (3, TB)  logits, classes on sublanes, batch on lanes
    label_ref: (1, TB)  int32 labels in {0,1,2} (padding lanes masked below)
    out_ref:   (1,)     f32 SMEM output (written on the last program)
    acc_ref:   (1,)     f32 SMEM running sum across grid steps
    """
    i = pl.program_id(0)
    tb = pred_ref.shape[1]

    @pl.when(i == 0)
    def _init():
        acc_ref[0] = jnp.float32(0.0)

    pred = pred_ref[...].astype(jnp.float32)      # (3, TB)
    labels = label_ref[...]                        # (1, TB) int32

    r0 = pred[0:1, :]                              # (1, TB) per-class rows
    r1 = pred[1:2, :]
    r2 = pred[2:3, :]

    # log-sum-exp over the 3 classes, elementwise across lanes (3 exp + 1 log).
    m = jnp.maximum(jnp.maximum(r0, r1), r2)
    lse = m + jnp.log(jnp.exp(r0 - m) + jnp.exp(r1 - m) + jnp.exp(r2 - m))

    # pred at the label class / class weight via a cheap 3-way select chain.
    is0 = labels == 0
    is1 = labels == 1
    pred_lab = jnp.where(is0, r0, jnp.where(is1, r1, r2))     # (1, TB)
    sum_pred = r0 + r1 + r2                                    # (1, TB)

    s = jnp.float32(smoothing)
    # sum_c smoothed_c == 1  =>  loss = lse - [(1-s)*pred_label + (s/3)*sum_c pred_c]
    loss = lse - ((jnp.float32(1.0) - s) * pred_lab + (s / jnp.float32(3.0)) * sum_pred)

    w = jnp.where(is0, jnp.float32(w0),
                  jnp.where(is1, jnp.float32(w1), jnp.float32(w2)))

    # Mask lanes beyond the real batch (wrapper pads B up to a multiple of TB).
    lane = lax.broadcasted_iota(jnp.int32, (1, tb), 1) + i * tb
    contrib = jnp.where(lane < n_valid, loss * w, jnp.float32(0.0))

    # Per-tile partial sum (tree-reduced in f32), accumulated across grid steps.
    acc_ref[0] += jnp.sum(contrib)

    @pl.when(i == pl.num_programs(0) - 1)
    def _finalize():
        out_ref[0] = acc_ref[0] * jnp.float32(1.0 / n_valid)


def weighted_label_smooth_ce_loss(pred, label, len_0, len_1, len_2, smoothing=0.1):
    """pred: (B, 3) float32/bf16 logits, label: (B,) integer in {0,1,2}.

    len_0/len_1/len_2 are the static dataset sizes from the module's __init__;
    class weights total/len_c are baked into the kernel as constants.
    """
    B, C = pred.shape
    assert C == 3, "module is hard-coded to 3 classes"

    total = float(len_0 + len_1 + len_2)
    w0 = total / float(len_0)
    w1 = total / float(len_1)
    w2 = total / float(len_2)

    def _round_up(x, m):
        return (x + m - 1) // m * m

    # Lane tile: multiple of 128, capped at 2048 lanes to stay well under VMEM
    # on every generation while amortizing per-step overhead.
    TB = min(2048, _round_up(B, 128))
    B_pad = _round_up(B, TB)
    num_tiles = B_pad // TB

    # Lane-dense layout: batch on the lane axis.
    pred_t = jnp.transpose(pred)                         # (3, B)
    labels = label.astype(jnp.int32)
    if B_pad != B:
        pred_t = jnp.pad(pred_t, ((0, 0), (0, B_pad - B)))
        labels = jnp.pad(labels, (0, B_pad - B))
    labels2d = labels.reshape(1, B_pad)

    kernel = functools.partial(
        _loss_kernel,
        smoothing=float(smoothing),
        n_valid=int(B),
        w0=w0, w1=w1, w2=w2,
    )

    out = pl.pallas_call(
        kernel,
        out_shape=jax.ShapeDtypeStruct((1,), jnp.float32),
        grid_spec=pltpu.PrefetchScalarGridSpec(
            num_scalar_prefetch=0,
            grid=(num_tiles,),
            in_specs=[
                pl.BlockSpec((3, TB), lambda i: (0, i)),   # logits tile
                pl.BlockSpec((1, TB), lambda i: (0, i)),   # labels tile
            ],
            out_specs=pl.BlockSpec(memory_space=pltpu.MemorySpace.SMEM),
            scratch_shapes=[pltpu.SMEM((1,), jnp.float32)],
        ),
        compiler_params=pltpu.CompilerParams(
            dimension_semantics=("arbitrary",),  # reduction over batch tiles
        ),
        # TODO(synk): per-core partial-sum outputs would expose v7x megacore
        # parallelism; single-core accumulation is kept for simplicity here.
    )(pred_t, labels2d)
    return out


def make_class_weights(len_0, len_1, len_2):
    total = len_0 + len_1 + len_2
    return jnp.array(
        [float(total) / float(len_0),
         float(total) / float(len_1),
         float(total) / float(len_2)],
        dtype=jnp.float32,
    )


def _reference(pred, label, class_weights, smoothing=0.1):
    p = jax.nn.softmax(pred.astype(jnp.float32), axis=1)
    one_hot = jax.nn.one_hot(label, 3, dtype=jnp.float32)
    smoothed = (1.0 - smoothing) * one_hot + smoothing / pred.shape[1]
    loss = jnp.sum(-jnp.log(p) * smoothed, axis=-1)
    w = class_weights[label]
    return (jnp.sum(loss * w) / label.shape[0]).reshape(1)


if __name__ == "__main__":
    key = jax.random.PRNGKey(0)
    k_pred, k_label, k_pred2, k_label2 = jax.random.split(key, 4)

    LEN_0, LEN_1, LEN_2 = 100, 50, 25
    class_weights = make_class_weights(LEN_0, LEN_1, LEN_2)

    # Small case (matches the module's typical use).
    B, C = 8, 3
    pred = jax.random.normal(k_pred, (B, C), dtype=jnp.float32)
    label = jax.random.randint(k_label, (B,), 0, C, dtype=jnp.int32)

    out = weighted_label_smooth_ce_loss(pred, label, LEN_0, LEN_1, LEN_2, smoothing=0.1)
    out = jax.block_until_ready(out)
    ref = _reference(pred, label, class_weights, smoothing=0.1)
    assert out.shape == (1,)
    assert jnp.allclose(out, ref, rtol=1e-5, atol=1e-5), (out, ref)

    # Non-multiple-of-128 batch to exercise the padding mask.
    B2 = 300
    pred2 = jax.random.normal(k_pred2, (B2, C), dtype=jnp.float32)
    label2 = jax.random.randint(k_label2, (B2,), 0, C, dtype=jnp.int32)
    out2 = jax.block_until_ready(
        weighted_label_smooth_ce_loss(pred2, label2, LEN_0, LEN_1, LEN_2, smoothing=0.1)
    )
    ref2 = _reference(pred2, label2, class_weights, smoothing=0.1)
    assert jnp.allclose(out2, ref2, rtol=1e-5, atol=1e-5), (out2, ref2)

    print("KERNEL_OK")
</pallas_src>

<mosaic_0001>
module attributes {stable_mosaic.version = 11 : i64} {
  func.func @_loss_kernel(%arg0: i32, %arg1: memref<3x128xf32, #tpu.memory_space<vmem>>, %arg2: memref<1x128xi32, #tpu.memory_space<vmem>>, %arg3: memref<1xf32, #tpu.memory_space<smem>>, %arg4: memref<1xf32, #tpu.memory_space<smem>>) attributes {dimension_semantics = [#tpu.dimension_semantics<arbitrary>], iteration_bounds = array<i64: 1>, scalar_prefetch = 0 : i64, scratch_operands = 1 : i64, tpu.core_type = #tpu.core_type<tc>, window_params = [{transform_indices = @transform_0, window_bounds = array<i64: 3, 128>}, {transform_indices = @transform_1, window_bounds = array<i64: 1, 128>}, {transform_indices = @transform_2, window_bounds = array<i64: 1>}]} {
    %c0_i32 = arith.constant 0 : i32
    %0 = arith.cmpi eq, %arg0, %c0_i32 : i32
    %1 = arith.extui %0 : i1 to i32
    %c0_i32_0 = arith.constant 0 : i32
    %2 = arith.cmpi ne, %1, %c0_i32_0 : i32
    scf.if %2 {
      %cst_17 = arith.constant 0.000000e+00 : f32
      %c0_18 = arith.constant 0 : index
      %60 = memref.load %arg4[%c0_18] : memref<1xf32, #tpu.memory_space<smem>>
      memref.store %cst_17, %arg4[%c0_18] : memref<1xf32, #tpu.memory_space<smem>>
    } else {
    }
    %c0 = arith.constant 0 : index
    %c0_1 = arith.constant 0 : index
    %3 = vector.load %arg1[%c0, %c0_1] : memref<3x128xf32, #tpu.memory_space<vmem>>, vector<3x128xf32>
    %c0_2 = arith.constant 0 : index
    %c0_3 = arith.constant 0 : index
    %4 = vector.load %arg2[%c0_2, %c0_3] : memref<1x128xi32, #tpu.memory_space<vmem>>, vector<1x128xi32>
    %5 = vector.extract_strided_slice %3 {offsets = [0, 0], sizes = [1, 128], strides = [1, 1]} : vector<3x128xf32> to vector<1x128xf32>
    %6 = vector.extract_strided_slice %3 {offsets = [1, 0], sizes = [1, 128], strides = [1, 1]} : vector<3x128xf32> to vector<1x128xf32>
    %7 = vector.extract_strided_slice %3 {offsets = [2, 0], sizes = [1, 128], strides = [1, 1]} : vector<3x128xf32> to vector<1x128xf32>
    %8 = arith.maximumf %5, %6 : vector<1x128xf32>
    %9 = arith.maximumf %8, %7 : vector<1x128xf32>
    %10 = arith.subf %5, %9 : vector<1x128xf32>
    %11 = math.exp %10 : vector<1x128xf32>
    %12 = arith.subf %6, %9 : vector<1x128xf32>
    %13 = math.exp %12 : vector<1x128xf32>
    %14 = arith.addf %11, %13 : vector<1x128xf32>
    %15 = arith.subf %7, %9 : vector<1x128xf32>
    %16 = math.exp %15 : vector<1x128xf32>
    %17 = arith.addf %14, %16 : vector<1x128xf32>
    %18 = math.log %17 : vector<1x128xf32>
    %19 = arith.addf %9, %18 : vector<1x128xf32>
    %c0_i32_4 = arith.constant 0 : i32
    %20 = vector.broadcast %c0_i32_4 : i32 to vector<1x128xi32>
    %21 = arith.cmpi eq, %4, %20 : vector<1x128xi32>
    %c1_i32 = arith.constant 1 : i32
    %22 = vector.broadcast %c1_i32 : i32 to vector<1x128xi32>
    %23 = arith.cmpi eq, %4, %22 : vector<1x128xi32>
    %24 = arith.select %23, %6, %7 : vector<1x128xi1>, vector<1x128xf32>
    %25 = arith.select %21, %5, %24 : vector<1x128xi1>, vector<1x128xf32>
    %26 = arith.addf %5, %6 : vector<1x128xf32>
    %27 = arith.addf %26, %7 : vector<1x128xf32>
    %cst = arith.constant 1.000000e+00 : f32
    %cst_5 = arith.constant 1.000000e-01 : f32
    %28 = arith.subf %cst, %cst_5 : f32
    %29 = vector.broadcast %28 : f32 to vector<1x128xf32>
    %30 = arith.mulf %29, %25 : vector<1x128xf32>
    %cst_6 = arith.constant 1.000000e-01 : f32
    %cst_7 = arith.constant 3.000000e+00 : f32
    %31 = arith.divf %cst_6, %cst_7 : f32
    %32 = vector.broadcast %31 : f32 to vector<1x128xf32>
    %33 = arith.mulf %32, %27 : vector<1x128xf32>
    %34 = arith.addf %30, %33 : vector<1x128xf32>
    %35 = arith.subf %19, %34 : vector<1x128xf32>
    %cst_8 = arith.constant 3.500000e+00 : f32
    %cst_9 = arith.constant 7.000000e+00 : f32
    %36 = vector.broadcast %cst_8 : f32 to vector<1x128xf32>
    %37 = vector.broadcast %cst_9 : f32 to vector<1x128xf32>
    %38 = arith.select %23, %36, %37 : vector<1x128xi1>, vector<1x128xf32>
    %cst_10 = arith.constant 1.750000e+00 : f32
    %39 = vector.broadcast %cst_10 : f32 to vector<1x128xf32>
    %40 = arith.select %21, %39, %38 : vector<1x128xi1>, vector<1x128xf32>
    %41 = tpu.iota {dimensions = array<i32: 1>} : vector<1x128xi32>
    %c128_i32 = arith.constant 128 : i32
    %42 = arith.muli %arg0, %c128_i32 : i32
    %43 = vector.broadcast %42 : i32 to vector<1x128xi32>
    %44 = arith.addi %41, %43 : vector<1x128xi32>
    %c8_i32 = arith.constant 8 : i32
    %45 = vector.broadcast %c8_i32 : i32 to vector<1x128xi32>
    %46 = arith.cmpi slt, %44, %45 : vector<1x128xi32>
    %47 = arith.mulf %35, %40 : vector<1x128xf32>
    %cst_11 = arith.constant 0.000000e+00 : f32
    %48 = vector.broadcast %cst_11 : f32 to vector<1x128xf32>
    %49 = arith.select %46, %47, %48 : vector<1x128xi1>, vector<1x128xf32>
    %c0_12 = arith.constant 0 : index
    %50 = memref.load %arg4[%c0_12] : memref<1xf32, #tpu.memory_space<smem>>
    %51 = vector.shape_cast %49 : vector<1x128xf32> to vector<1x1x128xf32>
    %cst_13 = arith.constant dense<0.000000e+00> : vector<1xf32>
    %52 = vector.multi_reduction <add>, %51, %cst_13 [1, 2] : vector<1x1x128xf32> to vector<1xf32>
    %53 = vector.shape_cast %52 : vector<1xf32> to vector<1x1x1xf32>
    %54 = vector.extract %53[0, 0, 0] : f32 from vector<1x1x1xf32>
    %55 = arith.addf %50, %54 : f32
    %c0_14 = arith.constant 0 : index
    %56 = memref.load %arg4[%c0_14] : memref<1xf32, #tpu.memory_space<smem>>
    memref.store %55, %arg4[%c0_14] : memref<1xf32, #tpu.memory_space<smem>>
    %c0_i32_15 = arith.constant 0 : i32
    %57 = arith.cmpi eq, %arg0, %c0_i32_15 : i32
    %58 = arith.extui %57 : i1 to i32
    %c0_i32_16 = arith.constant 0 : i32
    %59 = arith.cmpi ne, %58, %c0_i32_16 : i32
    scf.if %59 {
      %c0_17 = arith.constant 0 : index
      %60 = memref.load %arg4[%c0_17] : memref<1xf32, #tpu.memory_space<smem>>
      %cst_18 = arith.constant 1.250000e-01 : f32
      %61 = arith.mulf %60, %cst_18 : f32
      %c0_19 = arith.constant 0 : index
      %62 = memref.load %arg3[%c0_19] : memref<1xf32, #tpu.memory_space<smem>>
      memref.store %61, %arg3[%c0_19] : memref<1xf32, #tpu.memory_space<smem>>
    } else {
    }
    return
  }
  func.func @transform_0(%arg0: i32) -> (i32, i32) {
    %c0_i32 = arith.constant 0 : i32
    %c0_i32_0 = arith.constant 0 : i32
    return %c0_i32, %arg0 : i32, i32
  }
  func.func @transform_1(%arg0: i32) -> (i32, i32) {
    %c0_i32 = arith.constant 0 : i32
    %c0_i32_0 = arith.constant 0 : i32
    return %c0_i32, %arg0 : i32, i32
  }
  func.func @transform_2(%arg0: i32) -> i32 {
    %c0_i32 = arith.constant 0 : i32
    %c0_i32_0 = arith.constant 0 : i32
    return %c0_i32 : i32
  }
}

</mosaic_0001>

<llo_original>
// kernel: tpu_custom_call.1
$region0: #{tpu_custom_call.1}
  #allocation0 [shape = 'u32[]', space=smem, size = 0x4, offset = 0x4, fixed_abs, tag = 'smem constant byte address 0x4 - core index']
  #allocation1 [shape = 'u32[72,128]{1,0:T(1,128)}', space=vmem, size = 0x9000, scoped, tag = 'internal scratch']
  #allocation2 [shape = 'f32[1]{0:T(128)}', space=smem, size = 0x200, scoped, tag = 'scratch operand']
  %s0 = inlined_call_operand.hbm [shape: f32[3,128], index: 0, kind: input, shape index: {}]
  %s1 = inlined_call_operand.hbm [shape: s32[1,128], index: 1, kind: input, shape index: {}]
  %s2 = inlined_call_operand.hbm [shape: f32[1], index: 2, kind: output, shape index: {}]
  %s3 = sld [smem:[#allocation0]]
  $region34: #{tpu_custom_call.1} parent=0
    _
  %s5 = ssub.s32 1, %s3
  %s6 = scalar_select 0, %s5, %s3
  $region1: #{tpu_custom_call.1} parent=0
    #allocation3 [shape = 'u8[2048]{0}', space=vmem, size = 0x800, scoped, tag = 'input window, operand 0, single buffered']
    #allocation4 [shape = 's32[1]{0}', space=sflag, size = 0x4, scoped, tag = 'scoped memory for tpu_custom_call.1']
    #allocation5 [shape = 's32[1]{0}', space=sflag, size = 0x4, scoped, tag = 'scoped memory for tpu_custom_call.1']
    #allocation6 [shape = 'u8[512]{0}', space=vmem, size = 0x400, scoped, tag = 'input window, operand 1, single buffered']
    #allocation7 [shape = 's32[1]{0}', space=sflag, size = 0x4, scoped, tag = 'scoped memory for tpu_custom_call.1']
    #allocation8 [shape = 'u8[512]{0}', space=smem, size = 0x200, scoped, tag = 'output window, operand 0, single buffered']
    %7 = vsyncpa [#allocation4], 0
    %8 = vsyncpa [#allocation7], 0
    %9 = vsyncpa [#allocation5], 0
    // Predicated region
    $region2: #{tpu_custom_call.1} parent=1 // pred_check
      _
    $region3: #{tpu_custom_call.1} parent=1 // pred_check_branch
      %11 = sbr.rel (0) target = $region5
    $region4: #{tpu_custom_call.1} parent=1 // pred_region
      %13 = vsyncadd [#allocation4], 0
      %s15 = sshll.u32 %s0, 4
      %s16 = int_to_ptr.hbm [resolvable:$true] %s15
      %s17 = sshll.u32 [#allocation3], 4
      %s18 = int_to_ptr.vmem [resolvable:$true] %s17
      %20 = dma.hbm_to_vmem [thread:$0]  %s16, 64, %s18, [#allocation4]
    $region5: #{tpu_custom_call.1} parent=1 // pred_fallthru
      _
    // Predicated region
    $region6: #{tpu_custom_call.1} parent=1 // pred_check
      _
    $region7: #{tpu_custom_call.1} parent=1 // pred_check_branch
      %22 = sbr.rel (0) target = $region9
    $region8: #{tpu_custom_call.1} parent=1 // pred_region
      %24 = vsyncadd [#allocation7], 0
      %s26 = sshll.u32 %s1, 4
      %s27 = int_to_ptr.hbm [resolvable:$true] %s26
      %s28 = sshll.u32 [#allocation6], 4
      %s29 = int_to_ptr.vmem [resolvable:$true] %s28
      %31 = dma.hbm_to_vmem [thread:$0]  %s27, 16, %s29, [#allocation7]
    $region9: #{tpu_custom_call.1} parent=1 // pred_fallthru
      _
    // Predicated region
    $region10: #{tpu_custom_call.1} parent=1 // pred_check
      _
    $region11: #{tpu_custom_call.1} parent=1 // pred_check_branch
      %33 = sbr.rel (0) target = $region13
    $region12: #{tpu_custom_call.1} parent=1 // pred_region
      %35 = dma.done [#allocation4], 64
    $region13: #{tpu_custom_call.1} parent=1 // pred_fallthru
      _
    // Predicated region
    $region14: #{tpu_custom_call.1} parent=1 // pred_check
      _
    $region15: #{tpu_custom_call.1} parent=1 // pred_check_branch
      %37 = sbr.rel (0) target = $region17
    $region16: #{tpu_custom_call.1} parent=1 // pred_region
      %39 = dma.done [#allocation7], 16
    $region17: #{tpu_custom_call.1} parent=1 // pred_fallthru
      _
    %p40 = scmp.eq.s32.totalorder 0, 0
    // Predicated region
    $region18: #{tpu_custom_call.1} parent=1 // pred_check
      %p41 = pneg %p40
    $region19: #{tpu_custom_call.1} parent=1 // pred_check_branch
      %43 = sbr.rel (%p41) target = $region21
    $region20: #{tpu_custom_call.1} parent=1 // pred_region
      %s44 = scalar_lea.smem [#allocation2], 0
      %45 = sst [smem:[%s44]] 0.0
    $region21: #{tpu_custom_call.1} parent=1 // pred_fallthru
      _
    %v46 = vld [vmem:[#allocation3] sm:$0x7]
    %v47 = vld [vmem:[#allocation6] sm:$0x1]
    %v49 = vrot.slane %v46, 1
    %v51 = vmax.f32 %v46, %v49
    %v52 = vrot.slane %v46, 2
    %v54 = vmax.f32 %v51, %v52
    %v55 = vsub.f32 %v46, %v54
    %v56 = vmul.f32 %v55, 1.442695
    %v57 = vpow.pop %v56
    %v59 = vrot.slane %v54, 7
    %v61 = vsub.f32 %v46, %v59
    %v62 = vmul.f32 %v61, 1.442695
    %v63 = vpow.pop %v62
    %v65 = vrot.slane %v63, 1
    %v67 = vadd.f32 %v57, %v65
    %v68 = vrot.slane %v54, 6
    %v70 = vsub.f32 %v46, %v68
    %v71 = vmul.f32 %v70, 1.442695
    %v72 = vpow.pop %v71
    %v74 = vrot.slane %v72, 2
    %v76 = vadd.f32 %v67, %v74
    %v77 = vlog2.pop %v76
    %v78 = vmul.f32 %v77, 0.6931472
    %v79 = vadd.f32 %v54, %v78
    %vm80 = vcmp.eq.s32.totalorder %v47, 0
    %vm81 = vcmp.eq.s32.totalorder %v47, 1
    %82 = vst [vmem:[#allocation1] sm:$0xff] %v46
    %s83 = scalar_lea.vmem [#allocation1], 1
    %v84 = vld [vmem:[%s83] ss:$9 sm:$0xff]
    %86 = vst [vmem:[#allocation1] sm:$0xff] %v46
    %s87 = scalar_lea.vmem [#allocation1], 2
    %v88 = vld [vmem:[%s87] ss:$9 sm:$0xff]
    %v90 = vsel %vm81, %v84, %v88
    %v91 = vsel %vm80, %v46, %v90
    %v92 = vadd.f32 %v46, %v49
    %v93 = vadd.f32 %v92, %v52
    %v94 = vmul.f32 %v91, 0.9
    %v95 = vmul.f32 %v93, 0.033333335
    %v96 = vadd.f32 %v94, %v95
    %v97 = vsub.f32 %v79, %v96
    %v98 = vsel %vm81, 3.5, 7.0
    %v99 = vsel %vm80, 1.75, %v98
    %v100 = vlaneseq
    %v101 = vand.u32 %v100, 127
    %s102 = smul.u32 0, 128
    %v103 = vstv %s102
    %v104 = vadd.s32 %v101, %v103
    %vm105 = vcmp.lt.s32.totalorder %v104, 8
    %v106 = vmul.f32 %v97, %v99
    %v107 = vsel %vm105, %v106, 0.0
    %s108 = sld [smem:[#allocation2]]
    %vm109 = vcmask 1040384
    %v110 = vsel %vm109, %v107, 0.0
    %111 = vadd.xlane.f32.xlu0 %v110
    %v112 = vpop.xlane.xlu0 %111
    %v113 = vrot.slane %v112, 4
    %v114 = vadd.f32 %v112, %v113
    %v115 = vrot.slane %v114, 2
    %v116 = vadd.f32 %v114, %v115
    %v117 = vrot.slane %v116, 1
    %v118 = vadd.f32 %v116, %v117
    %s119 = vtos %v118
    %s120 = sadd.f32 %s108, %s119
    %s121 = scalar_lea.smem [#allocation2], 0
    %122 = sst [smem:[%s121]] %s120
    // Predicated region
    $region22: #{tpu_custom_call.1} parent=1 // pred_check
      %p123 = pneg %p40
    $region23: #{tpu_custom_call.1} parent=1 // pred_check_branch
      %125 = sbr.rel (%p123) target = $region25
    $region24: #{tpu_custom_call.1} parent=1 // pred_region
      %s126 = sld [smem:[#allocation2]]
      %s127 = smul.f32 %s126, 0.125
      %s128 = scalar_lea.smem [#allocation8], 0
      %129 = sst [smem:[%s128]] %s127
    $region25: #{tpu_custom_call.1} parent=1 // pred_fallthru
      _
    // Predicated region
    $region26: #{tpu_custom_call.1} parent=1 // pred_check
      _
    $region27: #{tpu_custom_call.1} parent=1 // pred_check_branch
      %131 = sbr.rel (0) target = $region29
    $region28: #{tpu_custom_call.1} parent=1 // pred_region
      %133 = vsyncadd [#allocation5], 0
      %s135 = sshll.u32 %s2, 4
      %s136 = int_to_ptr.hbm [resolvable:$true] %s135
      %138 = dma.smem_to_hbm [#allocation8], 16, %s136, [#allocation5]
    $region29: #{tpu_custom_call.1} parent=1 // pred_fallthru
      _
    // Predicated region
    $region30: #{tpu_custom_call.1} parent=1 // pred_check
      _
    $region31: #{tpu_custom_call.1} parent=1 // pred_check_branch
      %140 = sbr.rel (0) target = $region33
    $region32: #{tpu_custom_call.1} parent=1 // pred_region
      %142 = dma.done [#allocation5], 16
    $region33: #{tpu_custom_call.1} parent=1 // pred_fallthru
      _
    %143 = sfence
    %144 = vsyncpa [#allocation4], 1
    %145 = vsyncpa [#allocation7], 1
    %146 = vsyncpa [#allocation5], 1

</llo_original>
